<compile_context>
chip_gen: v5e
topology: v5e:2x2
jax: 0.10.0
libtpu: 0.0.40
codegen_flags: <defaults>
</compile_context>

<pallas_src>
import jax
import jax.numpy as jnp
import numpy as np
from jax import lax
from jax.experimental import pallas as pl
from jax.experimental.pallas import tpu as pltpu


def _round_up(x, m):
    return ((x + m - 1) // m) * m


def _global_attention_kernel(lens_ref, q_ref, mem_ref, wc_ref, wq_ref,
                             attn_h_ref, align_ref):
    b = pl.program_id(0)

    q = q_ref[0]            # (tq, DIM_P)
    mem = mem_ref[0]        # (SRC_P, DIM_P)
    w_c = wc_ref[...]       # (DIM_P, DIM_P)
    w_q = wq_ref[...]       # (DIM_P, DIM_P)

    # --- score (dot attention): contraction over dim, no mem.T materialized --
    s = lax.dot_general(q, mem, (((1,), (1,)), ((), ())),
                        preferred_element_type=jnp.float32)      # (tq, SRC_P)

    # --- sequence-length mask: positions >= memory_lengths[b] -> -inf --------
    length = lens_ref[b]
    src_idx = lax.broadcasted_iota(jnp.int32, s.shape, 1)         # single iota
    s = jnp.where(src_idx < length, s, -jnp.inf)

    # --- softmax over src (EUP approx reciprocal + one Newton step) ----------
    m = jnp.max(s, axis=-1, keepdims=True)
    e = jnp.exp(s - m)
    denom = jnp.sum(e, axis=-1, keepdims=True)
    r = pl.reciprocal(denom, approx=True)
    r = r * (2.0 - denom * r)                 # Newton step -> ~f32 accuracy
    a = e * r

    # --- context + linear_out([c, q]) with pre-split / pre-transposed weights
    c = jnp.dot(a.astype(mem.dtype), mem, preferred_element_type=jnp.float32)
    h = jnp.dot(c.astype(w_c.dtype), w_c, preferred_element_type=jnp.float32)
    h = h + jnp.dot(q, w_q, preferred_element_type=jnp.float32)

    # Direct lane-dense stores in the final (PyTorch) layout.
    attn_h_ref[...] = jnp.tanh(h).astype(attn_h_ref.dtype)
    align_ref[...] = a.astype(align_ref.dtype)


def _vmem_budget_bytes():
    """~75% of physical VMEM, capped at 100 MiB; 48 MiB budget on failure."""
    try:
        cap = int(pltpu.get_tpu_info().vmem_capacity_bytes)
    except Exception:                 # query unavailable -> v7x-safe fallback
        cap = 64 * 2 ** 20
    return min(int(cap * 0.75), 100 * 2 ** 20), cap


def global_attention(inp, memory_bank, memory_lengths, w_out):
    """Pallas GlobalAttention forward (attn_type='dot').

    Args:
      inp:            [batch, tgt_len, dim] query vectors
      memory_bank:    [batch, src_len, dim] source vectors
      memory_lengths: [batch] int valid source lengths
      w_out:          [dim, 2*dim] linear_out weight (no bias for dot attn)

    Returns:
      attn_h        [tgt_len, batch, dim]
      align_vectors [tgt_len, batch, src_len]
      ret_align_vectors = None
    """
    batch, tgt_len, dim = inp.shape
    _, src_len, _ = memory_bank.shape
    out_dtype = inp.dtype
    itemsize = jnp.dtype(out_dtype).itemsize

    # ---- pad to lane-dense extents (length mask already zeroes padded keys) --
    dim_p = _round_up(dim, 128)
    src_p = _round_up(src_len, 128)

    budget, cap = _vmem_budget_bytes()

    def footprint(tq):
        # Double-buffered inputs + outputs (Pallas defaults) + f32 temporaries.
        in_b = 2 * (tq * dim_p + src_p * dim_p + 2 * dim_p * dim_p) * itemsize
        out_b = 2 * (tq * dim_p + tq * src_p) * itemsize
        tmp_b = (3 * tq * src_p + 3 * tq * dim_p) * 4
        return in_b + out_b + tmp_b

    # 256-row tiles fill the 256-wide MXU on v6e/v7x; shrink (never below 8)
    # only if the per-step footprint exceeds the per-generation VMEM budget.
    tq = min(256, _round_up(tgt_len, 8))
    while tq > 8 and footprint(tq) > budget:
        tq = max(8, _round_up(tq // 2, 8))
    tgt_p = _round_up(tgt_len, tq)

    if tgt_p != tgt_len or dim_p != dim:
        inp_p = jnp.pad(inp, ((0, 0), (0, tgt_p - tgt_len), (0, dim_p - dim)))
    else:
        inp_p = inp
    if src_p != src_len or dim_p != dim:
        mem_p = jnp.pad(memory_bank,
                        ((0, 0), (0, src_p - src_len), (0, dim_p - dim)))
    else:
        mem_p = memory_bank

    # One-time weight prep (out of the hot loop):
    #   attn_h = [c, q] @ W^T = c @ W[:, :dim]^T + q @ W[:, dim:]^T
    w_c = jnp.transpose(w_out[:, :dim]).astype(out_dtype)
    w_q = jnp.transpose(w_out[:, dim:]).astype(out_dtype)
    if dim_p != dim:
        w_c = jnp.pad(w_c, ((0, dim_p - dim), (0, dim_p - dim)))
        w_q = jnp.pad(w_q, ((0, dim_p - dim), (0, dim_p - dim)))

    fp = footprint(tq)
    vmem_limit = int(max(min(2 * fp, budget), fp, 32 * 2 ** 20))
    vmem_limit = min(vmem_limit, int(cap * 0.9))

    grid = (batch, tgt_p // tq)       # batch outer, tgt inner (mem block reuse)

    grid_spec = pltpu.PrefetchScalarGridSpec(
        num_scalar_prefetch=1,                        # memory_lengths -> SMEM
        grid=grid,
        in_specs=[
            pl.BlockSpec((1, tq, dim_p), lambda b, t, lens: (b, t, 0)),
            pl.BlockSpec((1, src_p, dim_p), lambda b, t, lens: (b, 0, 0)),
            pl.BlockSpec((dim_p, dim_p), lambda b, t, lens: (0, 0)),
            pl.BlockSpec((dim_p, dim_p), lambda b, t, lens: (0, 0)),
        ],
        out_specs=[
            pl.BlockSpec((tq, dim_p), lambda b, t, lens: (t, b)),
            pl.BlockSpec((tq, src_p), lambda b, t, lens: (t, b)),
        ],
    )

    attn_h2, align2 = pl.pallas_call(
        _global_attention_kernel,
        grid_spec=grid_spec,
        out_shape=(
            jax.ShapeDtypeStruct((tgt_p, batch * dim_p), out_dtype),
            jax.ShapeDtypeStruct((tgt_p, batch * src_p), out_dtype),
        ),
        compiler_params=pltpu.CompilerParams(
            dimension_semantics=("parallel", "parallel"),
            vmem_limit_bytes=vmem_limit),
    )(memory_lengths.astype(jnp.int32), inp_p, mem_p, w_c, w_q)

    # Fused outputs are already in the PyTorch layout; only cheap reshapes and
    # padding slices remain (no HBM transpose passes).
    attn_h = attn_h2.reshape(tgt_p, batch, dim_p)[:tgt_len, :, :dim]
    align = align2.reshape(tgt_p, batch, src_p)[:tgt_len, :, :src_len]
    return attn_h, align, None


def _reference(inp, memory_bank, memory_lengths, w_out):
    """Pure-numpy reference of the PyTorch forward (dot attention)."""
    inp = np.asarray(inp, np.float32)
    mem = np.asarray(memory_bank, np.float32)
    lens = np.asarray(memory_lengths)
    w = np.asarray(w_out, np.float32)
    batch, tgt_len, dim = inp.shape
    src_len = mem.shape[1]

    align = np.einsum('btd,bsd->bts', inp, mem)
    mask = np.arange(src_len)[None, None, :] < lens[:, None, None]
    align = np.where(mask, align, -np.inf)
    m = align.max(-1, keepdims=True)
    e = np.exp(align - m)
    a = e / e.sum(-1, keepdims=True)
    c = np.einsum('bts,bsd->btd', a, mem)
    concat = np.concatenate([c, inp], axis=2).reshape(batch * tgt_len, 2 * dim)
    attn_h = np.tanh(concat @ w.T).reshape(batch, tgt_len, dim)
    return attn_h.transpose(1, 0, 2), a.transpose(1, 0, 2)


if __name__ == "__main__":
    batch, tgt_len, src_len, dim = 2, 4, 8, 32

    key = jax.random.PRNGKey(0)
    k1, k2, k3 = jax.random.split(key, 3)

    inp = jax.random.normal(k1, (batch, tgt_len, dim), jnp.float32)
    memory_bank = jax.random.normal(k2, (batch, src_len, dim), jnp.float32)
    memory_lengths = jnp.array([src_len, 5], dtype=jnp.int32)

    # nn.Linear(dim*2, dim, bias=False) weight -> [dim, 2*dim]
    bound = 1.0 / np.sqrt(2 * dim)
    w_out = jax.random.uniform(k3, (dim, 2 * dim), jnp.float32,
                               minval=-bound, maxval=bound)

    attn_h, align_vectors, _ = global_attention(
        inp, memory_bank, memory_lengths, w_out)
    attn_h = jax.block_until_ready(attn_h)
    align_vectors = jax.block_until_ready(align_vectors)

    ref_h, ref_a = _reference(inp, memory_bank, memory_lengths, w_out)
    np.testing.assert_allclose(np.asarray(attn_h), ref_h, rtol=1e-5, atol=1e-5)
    np.testing.assert_allclose(np.asarray(align_vectors), ref_a,
                               rtol=1e-5, atol=1e-5)

    print("KERNEL_OK")
</pallas_src>

<mosaic_0001>
module attributes {stable_mosaic.version = 11 : i64} {
  func.func @_global_attention_kernel(%arg0: i32, %arg1: i32, %arg2: memref<2xi32, #tpu.memory_space<smem>>, %arg3: memref<1x8x128xf32, #tpu.memory_space<vmem>>, %arg4: memref<1x128x128xf32, #tpu.memory_space<vmem>>, %arg5: memref<128x128xf32, #tpu.memory_space<vmem>>, %arg6: memref<128x128xf32, #tpu.memory_space<vmem>>, %arg7: memref<8x128xf32, #tpu.memory_space<vmem>>, %arg8: memref<8x128xf32, #tpu.memory_space<vmem>>) attributes {dimension_semantics = [#tpu.dimension_semantics<parallel>, #tpu.dimension_semantics<parallel>], iteration_bounds = array<i64: 2, 1>, scalar_prefetch = 1 : i64, scratch_operands = 0 : i64, tpu.core_type = #tpu.core_type<tc>, window_params = [{transform_indices = @transform_0, window_bounds = array<i64: 1, 8, 128>}, {transform_indices = @transform_1, window_bounds = array<i64: 1, 128, 128>}, {pipeline_mode = #tpu.pipeline_mode<synchronous>, transform_indices = @transform_2, window_bounds = array<i64: 128, 128>}, {pipeline_mode = #tpu.pipeline_mode<synchronous>, transform_indices = @transform_3, window_bounds = array<i64: 128, 128>}, {transform_indices = @transform_4, window_bounds = array<i64: 8, 128>}, {transform_indices = @transform_5, window_bounds = array<i64: 8, 128>}]} {
    %c0 = arith.constant 0 : index
    %c0_0 = arith.constant 0 : index
    %c0_1 = arith.constant 0 : index
    %0 = vector.load %arg3[%c0, %c0_0, %c0_1] : memref<1x8x128xf32, #tpu.memory_space<vmem>>, vector<1x8x128xf32>
    %1 = vector.shape_cast %0 : vector<1x8x128xf32> to vector<8x128xf32>
    %c0_2 = arith.constant 0 : index
    %c0_3 = arith.constant 0 : index
    %c0_4 = arith.constant 0 : index
    %2 = vector.load %arg4[%c0_2, %c0_3, %c0_4] : memref<1x128x128xf32, #tpu.memory_space<vmem>>, vector<1x128x128xf32>
    %3 = vector.shape_cast %2 : vector<1x128x128xf32> to vector<128x128xf32>
    %c0_5 = arith.constant 0 : index
    %c0_6 = arith.constant 0 : index
    %4 = vector.load %arg5[%c0_5, %c0_6] : memref<128x128xf32, #tpu.memory_space<vmem>>, vector<128x128xf32>
    %c0_7 = arith.constant 0 : index
    %c0_8 = arith.constant 0 : index
    %5 = vector.load %arg6[%c0_7, %c0_8] : memref<128x128xf32, #tpu.memory_space<vmem>>, vector<128x128xf32>
    %cst = arith.constant dense<0.000000e+00> : vector<8x128xf32>
    %6 = tpu.matmul %1, %3, %cst {dimension_numbers = #tpu.dot_dimension_numbers<[1], [1], [0], [0], [0, 0, 1, 0], [], []>} : vector<8x128xf32>, vector<128x128xf32>, vector<8x128xf32> -> vector<8x128xf32>
    %7 = arith.index_cast %arg0 : i32 to index
    %8 = memref.load %arg2[%7] : memref<2xi32, #tpu.memory_space<smem>>
    %9 = tpu.iota {dimensions = array<i32: 1>} : vector<8x128xi32>
    %10 = vector.broadcast %8 : i32 to vector<8x128xi32>
    %11 = arith.cmpi slt, %9, %10 : vector<8x128xi32>
    %cst_9 = arith.constant 0xFF800000 : f32
    %12 = vector.broadcast %cst_9 : f32 to vector<8x128xf32>
    %13 = arith.select %11, %6, %12 : vector<8x128xi1>, vector<8x128xf32>
    %cst_10 = arith.constant dense<0xFF800000> : vector<8xf32>
    %14 = vector.multi_reduction <maximumf>, %13, %cst_10 [1] : vector<8x128xf32> to vector<8xf32>
    %15 = vector.shape_cast %14 : vector<8xf32> to vector<8x1xf32>
    %16 = vector.broadcast %15 : vector<8x1xf32> to vector<8x128xf32>
    %17 = arith.subf %13, %16 : vector<8x128xf32>
    %18 = math.exp %17 : vector<8x128xf32>
    %cst_11 = arith.constant dense<0.000000e+00> : vector<8xf32>
    %19 = vector.multi_reduction <add>, %18, %cst_11 [1] : vector<8x128xf32> to vector<8xf32>
    %20 = vector.shape_cast %19 : vector<8xf32> to vector<8x1xf32>
    %21 = tpu.reciprocal %20 {approx = true} : vector<8x1xf32> -> vector<8x1xf32>
    %22 = arith.mulf %20, %21 : vector<8x1xf32>
    %cst_12 = arith.constant 2.000000e+00 : f32
    %23 = vector.broadcast %cst_12 : f32 to vector<8x1xf32>
    %24 = arith.subf %23, %22 : vector<8x1xf32>
    %25 = arith.mulf %21, %24 : vector<8x1xf32>
    %26 = vector.broadcast %25 : vector<8x1xf32> to vector<8x128xf32>
    %27 = arith.mulf %18, %26 : vector<8x128xf32>
    %cst_13 = arith.constant dense<0.000000e+00> : vector<8x128xf32>
    %28 = tpu.matmul %27, %3, %cst_13 {dimension_numbers = #tpu.dot_dimension_numbers<[1], [0], [0], [1], [0, 0, 1, 1], [], []>} : vector<8x128xf32>, vector<128x128xf32>, vector<8x128xf32> -> vector<8x128xf32>
    %cst_14 = arith.constant dense<0.000000e+00> : vector<8x128xf32>
    %29 = tpu.matmul %28, %4, %cst_14 {dimension_numbers = #tpu.dot_dimension_numbers<[1], [0], [0], [1], [0, 0, 1, 1], [], []>} : vector<8x128xf32>, vector<128x128xf32>, vector<8x128xf32> -> vector<8x128xf32>
    %cst_15 = arith.constant dense<0.000000e+00> : vector<8x128xf32>
    %30 = tpu.matmul %1, %5, %cst_15 {dimension_numbers = #tpu.dot_dimension_numbers<[1], [0], [0], [1], [0, 0, 1, 1], [], []>} : vector<8x128xf32>, vector<128x128xf32>, vector<8x128xf32> -> vector<8x128xf32>
    %31 = arith.addf %29, %30 : vector<8x128xf32>
    %32 = math.tanh %31 : vector<8x128xf32>
    %c0_16 = arith.constant 0 : index
    %c0_17 = arith.constant 0 : index
    %33 = vector.load %arg7[%c0_16, %c0_17] : memref<8x128xf32, #tpu.memory_space<vmem>>, vector<8x128xf32>
    tpu.vector_store %arg7[%c0_16, %c0_17], %32 {strides = array<i32>} : memref<8x128xf32, #tpu.memory_space<vmem>>, vector<8x128xf32>,
    %c0_18 = arith.constant 0 : index
    %c0_19 = arith.constant 0 : index
    %34 = vector.load %arg8[%c0_18, %c0_19] : memref<8x128xf32, #tpu.memory_space<vmem>>, vector<8x128xf32>
    tpu.vector_store %arg8[%c0_18, %c0_19], %27 {strides = array<i32>} : memref<8x128xf32, #tpu.memory_space<vmem>>, vector<8x128xf32>,
    return
  }
  func.func @transform_0(%arg0: i32, %arg1: i32, %arg2: memref<2xi32, #tpu.memory_space<smem>>) -> (i32, i32, i32) {
    %c0_i32 = arith.constant 0 : i32
    %c0_i32_0 = arith.constant 0 : i32
    return %arg0, %arg1, %c0_i32 : i32, i32, i32
  }
  func.func @transform_1(%arg0: i32, %arg1: i32, %arg2: memref<2xi32, #tpu.memory_space<smem>>) -> (i32, i32, i32) {
    %c0_i32 = arith.constant 0 : i32
    %c0_i32_0 = arith.constant 0 : i32
    %c0_i32_1 = arith.constant 0 : i32
    return %arg0, %c0_i32, %c0_i32_0 : i32, i32, i32
  }
  func.func @transform_2(%arg0: i32, %arg1: i32, %arg2: memref<2xi32, #tpu.memory_space<smem>>) -> (i32, i32) {
    %c0_i32 = arith.constant 0 : i32
    %c0_i32_0 = arith.constant 0 : i32
    %c0_i32_1 = arith.constant 0 : i32
    return %c0_i32, %c0_i32_0 : i32, i32
  }
  func.func @transform_3(%arg0: i32, %arg1: i32, %arg2: memref<2xi32, #tpu.memory_space<smem>>) -> (i32, i32) {
    %c0_i32 = arith.constant 0 : i32
    %c0_i32_0 = arith.constant 0 : i32
    %c0_i32_1 = arith.constant 0 : i32
    return %c0_i32, %c0_i32_0 : i32, i32
  }
  func.func @transform_4(%arg0: i32, %arg1: i32, %arg2: memref<2xi32, #tpu.memory_space<smem>>) -> (i32, i32) {
    %c0_i32 = arith.constant 0 : i32
    return %arg1, %arg0 : i32, i32
  }
  func.func @transform_5(%arg0: i32, %arg1: i32, %arg2: memref<2xi32, #tpu.memory_space<smem>>) -> (i32, i32) {
    %c0_i32 = arith.constant 0 : i32
    return %arg1, %arg0 : i32, i32
  }
}

</mosaic_0001>

<llo_original>
// kernel: tpu_custom_call.1
$region0: #{tpu_custom_call.1}
  #allocation0 [shape = 'u32[]', space=smem, size = 0x4, offset = 0x4, fixed_abs, tag = 'smem constant byte address 0x4 - core index']
  #allocation1 [shape = 'u32[72,128]{1,0:T(1,128)}', space=vmem, size = 0x9000, scoped, tag = 'internal scratch']
  #allocation2 [shape = 's32[1]{0}', space=sflag, size = 0x4, scoped, tag = 'scoped memory for tpu_custom_call.1']
  #allocation3 [shape = 'u8[512]{0}', space=smem, size = 0x200, scoped, tag = 'prefetched SMEM operand 0']
  %s0 = inlined_call_operand.hbm [shape: s32[2], index: 0, kind: input, shape index: {}]
  %s1 = inlined_call_operand.hbm [shape: f32[2,8,128], index: 1, kind: input, shape index: {}]
  %s2 = inlined_call_operand.hbm [shape: f32[2,128,128], index: 2, kind: input, shape index: {}]
  %s3 = inlined_call_operand.hbm [shape: f32[128,128], index: 3, kind: input, shape index: {}]
  %s4 = inlined_call_operand.hbm [shape: f32[128,128], index: 4, kind: input, shape index: {}]
  %s5 = inlined_call_operand.hbm [shape: f32[8,256], index: 5, kind: output, shape index: {0}]
  %s6 = inlined_call_operand.hbm [shape: f32[8,256], index: 6, kind: output, shape index: {1}]
  %7 = xla_tuple %s5, %s6
  %s8 = sld [smem:[#allocation0]]
  $region73: #{tpu_custom_call.1} parent=0
    _
  %s10 = ssub.s32 1, %s8
  %s11 = scalar_select 0, %s10, %s8
  %s13 = sshll.u32 %s0, 4
  %s14 = int_to_ptr.hbm [resolvable:$true] %s13
  %16 = dma.hbm_to_smem %s14, 16, [#allocation3], [#allocation2]
  %18 = dma.done [#allocation2], 16
  %19 = sfence
  $region1: #{tpu_custom_call.1} parent=0
    #allocation4 [shape = 'u8[8192]{0}', space=vmem, size = 0x2000, scoped, tag = 'input window, operand 1']
    #allocation5 [shape = 's32[2]{0}', space=sflag, size = 0x8, scoped, tag = 'scoped memory for tpu_custom_call.1']
    #allocation6 [shape = 's32[2]{0}', space=sflag, size = 0x8, scoped, tag = 'scoped memory for tpu_custom_call.1']
    #allocation7 [shape = 'u8[131072]{0}', space=vmem, size = 0x20000, scoped, tag = 'input window, operand 2']
    #allocation8 [shape = 's32[2]{0}', space=sflag, size = 0x8, scoped, tag = 'scoped memory for tpu_custom_call.1']
    #allocation9 [shape = 'u8[65536]{0}', space=vmem, size = 0x10000, scoped, tag = 'input window, operand 3, single buffered']
    #allocation10 [shape = 'u8[65536]{0}', space=vmem, size = 0x10000, scoped, tag = 'input window, operand 4, single buffered']
    #allocation11 [shape = 's32[1]{0}', space=sflag, size = 0x4, scoped, tag = 'scoped memory for tpu_custom_call.1']
    #allocation12 [shape = 'u8[8192]{0}', space=vmem, size = 0x2000, scoped, tag = 'output window, operand 0']
    #allocation13 [shape = 'u8[8192]{0}', space=vmem, size = 0x2000, scoped, tag = 'output window, operand 1']
    #allocation14 [shape = 's32[2]{0}', space=sflag, size = 0x8, scoped, tag = 'scoped memory for tpu_custom_call.1']
    %20 = vsyncpa [#allocation5], 0
    %s21 = scalar_lea.sflag [#allocation5], 1
    %22 = vsyncpa %s21, 0
    %23 = vsyncpa [#allocation8], 0
    %s24 = scalar_lea.sflag [#allocation8], 1
    %25 = vsyncpa %s24, 0
    %26 = vsyncpa [#allocation11], 0
    %27 = vsyncpa [#allocation6], 0
    %s28 = scalar_lea.sflag [#allocation6], 1
    %29 = vsyncpa %s28, 0
    %30 = vsyncpa [#allocation14], 0
    %s31 = scalar_lea.sflag [#allocation14], 1
    %32 = vsyncpa %s31, 0
    loop: start=0, step=1, limit=4
    $region2: #{tpu_custom_call.1} parent=1 // loop_pre_header
      _
    $region3: #{tpu_custom_call.1} parent=1 // loop_header
      %s34 = sphi 0, %s38
      %p35 = scmp.ge.s32.totalorder %s34, 4
      %s41 = sphi 0, %s53
      %s42 = sphi 0, %s49
      %s43 = sphi 0, %s41
      %s44 = sphi 0, %s42
      %s45 = sphi 0, %s43
      %s46 = sphi 0, %s44
      %s58 = sphi 0, %s60
      %s61 = sphi 0, %s58
      %s62 = sphi 0, %s61
      %s78 = sphi 0, %s62
      %s84 = sphi 0, %s86
      %s87 = sphi 0, %s84
      %s88 = sphi 0, %s87
      %s104 = sphi 0, %s88
      %s108 = sphi 0, %s108
      %s110 = sphi 0, %s108
      %s111 = sphi 0, %s110
      %s125 = sphi 0, %s111
      %s129 = sphi 0, %s129
      %s131 = sphi 0, %s129
      %s132 = sphi 0, %s131
      %s146 = sphi 0, %s132
      %s154 = sphi 0, %s156
      %s157 = sphi 0, %s154
      %s158 = sphi 0, %s157
      %s174 = sphi 0, %s158
      %s182 = sphi 0, %s184
      %s185 = sphi 0, %s182
      %s186 = sphi 0, %s185
      %s202 = sphi 0, %s186
    $region4: #{tpu_custom_call.1} parent=1 // loop_header_branch
      %37 = sbr.rel (%p35) target = $region8
    $region5: #{tpu_custom_call.1} parent=1 // loop_body
      %s39 = ssub.s32 %s34, 1
      %s40 = ssub.s32 %s34, 2
      %s47 = sadd.s32 1, %s42
      %p48 = scmp.ge.s32.totalorder %s47, 1
      %s49 = scalar_select %p48, 0, %s47
      %s50 = sadd.s32 1, %s41
      %s51 = scalar_select %p48, %s50, %s41
      %p52 = scmp.ge.s32.totalorder %s51, 2
      %s53 = scalar_select %p52, 0, %s51
      %s54 = ssub.s32 %s41, %s53
      %s55 = ssub.s32 %s42, %s49
      %s56 = sor.u32 %s54, %s55
      %p57 = scmp.eq.s32.totalorder %s56, 0
      %s59 = sadd.s32 %s58, 1
      %s60 = scalar_select %p57, %s58, %s59
      %p63 = pneg %p57
      %p64 = scmp.eq.s32.totalorder %s34, 1
      %p65 = por %p63, %p64
      %p66 = scmp.ne.s32.totalorder %s58, %s61
      %p67 = scmp.eq.s32.totalorder %s34, 0
      %p68 = por %p66, %p67
      %p69 = scmp.ne.s32.totalorder %s58, %s61
      %p70 = scmp.eq.s32.totalorder %s39, 1
      %p71 = por %p69, %p70
      %p72 = scmp.ne.s32.totalorder %s61, %s62
      %p73 = scmp.eq.s32.totalorder %s39, 0
      %p74 = por %p72, %p73
      %p75 = scmp.ne.s32.totalorder %s61, %s62
      %p76 = scmp.eq.s32.totalorder %s40, 1
      %p77 = por %p75, %p76
      %p79 = scmp.ne.s32.totalorder %s62, %s78
      %p80 = scmp.eq.s32.totalorder %s40, 0
      %p81 = por %p79, %p80
      %s82 = ssub.s32 %s41, %s53
      %p83 = scmp.eq.s32.totalorder %s82, 0
      %s85 = sadd.s32 %s84, 1
      %s86 = scalar_select %p83, %s84, %s85
      %p89 = pneg %p83
      %p90 = scmp.eq.s32.totalorder %s34, 1
      %p91 = por %p89, %p90
      %p92 = scmp.ne.s32.totalorder %s84, %s87
      %p93 = scmp.eq.s32.totalorder %s34, 0
      %p94 = por %p92, %p93
      %p95 = scmp.ne.s32.totalorder %s84, %s87
      %p96 = scmp.eq.s32.totalorder %s39, 1
      %p97 = por %p95, %p96
      %p98 = scmp.ne.s32.totalorder %s87, %s88
      %p99 = scmp.eq.s32.totalorder %s39, 0
      %p100 = por %p98, %p99
      %p101 = scmp.ne.s32.totalorder %s87, %s88
      %p102 = scmp.eq.s32.totalorder %s40, 1
      %p103 = por %p101, %p102
      %p105 = scmp.ne.s32.totalorder %s88, %s104
      %p106 = scmp.eq.s32.totalorder %s40, 0
      %p107 = por %p105, %p106
      %s109 = sadd.s32 %s108, 1
      %p112 = scmp.eq.s32.totalorder %s34, 1
      %p113 = scmp.ne.s32.totalorder %s108, %s110
      %p114 = scmp.eq.s32.totalorder %s34, 0
      %p115 = por %p113, %p114
      %p116 = scmp.ne.s32.totalorder %s108, %s110
      %p117 = scmp.eq.s32.totalorder %s39, 1
      %p118 = por %p116, %p117
      %p119 = scmp.ne.s32.totalorder %s110, %s111
      %p120 = scmp.eq.s32.totalorder %s39, 0
      %p121 = por %p119, %p120
      %p122 = scmp.ne.s32.totalorder %s110, %s111
      %p123 = scmp.eq.s32.totalorder %s40, 1
      %p124 = por %p122, %p123
      %p126 = scmp.ne.s32.totalorder %s111, %s125
      %p127 = scmp.eq.s32.totalorder %s40, 0
      %p128 = por %p126, %p127
      %s130 = sadd.s32 %s129, 1
      %p133 = scmp.eq.s32.totalorder %s34, 1
      %p134 = scmp.ne.s32.totalorder %s129, %s131
      %p135 = scmp.eq.s32.totalorder %s34, 0
      %p136 = por %p134, %p135
      %p137 = scmp.ne.s32.totalorder %s129, %s131
      %p138 = scmp.eq.s32.totalorder %s39, 1
      %p139 = por %p137, %p138
      %p140 = scmp.ne.s32.totalorder %s131, %s132
      %p141 = scmp.eq.s32.totalorder %s39, 0
      %p142 = por %p140, %p141
      %p143 = scmp.ne.s32.totalorder %s131, %s132
      %p144 = scmp.eq.s32.totalorder %s40, 1
      %p145 = por %p143, %p144
      %p147 = scmp.ne.s32.totalorder %s132, %s146
      %p148 = scmp.eq.s32.totalorder %s40, 0
      %p149 = por %p147, %p148
      %s150 = ssub.s32 %s42, %s49
      %s151 = ssub.s32 %s41, %s53
      %s152 = sor.u32 %s150, %s151
      %p153 = scmp.eq.s32.totalorder %s152, 0
      %s155 = sadd.s32 %s154, 1
      %s156 = scalar_select %p153, %s154, %s155
      %p159 = pneg %p153
      %p160 = scmp.eq.s32.totalorder %s34, 1
      %p161 = por %p159, %p160
      %p162 = scmp.ne.s32.totalorder %s154, %s157
      %p163 = scmp.eq.s32.totalorder %s34, 0
      %p164 = por %p162, %p163
      %p165 = scmp.ne.s32.totalorder %s154, %s157
      %p166 = scmp.eq.s32.totalorder %s39, 1
      %p167 = por %p165, %p166
      %p168 = scmp.ne.s32.totalorder %s157, %s158
      %p169 = scmp.eq.s32.totalorder %s39, 0
      %p170 = por %p168, %p169
      %p171 = scmp.ne.s32.totalorder %s157, %s158
      %p172 = scmp.eq.s32.totalorder %s40, 1
      %p173 = por %p171, %p172
      %p175 = scmp.ne.s32.totalorder %s158, %s174
      %p176 = scmp.eq.s32.totalorder %s40, 0
      %p177 = por %p175, %p176
      %s178 = ssub.s32 %s42, %s49
      %s179 = ssub.s32 %s41, %s53
      %s180 = sor.u32 %s178, %s179
      %p181 = scmp.eq.s32.totalorder %s180, 0
      %s183 = sadd.s32 %s182, 1
      %s184 = scalar_select %p181, %s182, %s183
      %p187 = pneg %p181
      %p188 = scmp.eq.s32.totalorder %s34, 1
      %p189 = por %p187, %p188
      %p190 = scmp.ne.s32.totalorder %s182, %s185
      %p191 = scmp.eq.s32.totalorder %s34, 0
      %p192 = por %p190, %p191
      %p193 = scmp.ne.s32.totalorder %s182, %s185
      %p194 = scmp.eq.s32.totalorder %s39, 1
      %p195 = por %p193, %p194
      %p196 = scmp.ne.s32.totalorder %s185, %s186
      %p197 = scmp.eq.s32.totalorder %s39, 0
      %p198 = por %p196, %p197
      %p199 = scmp.ne.s32.totalorder %s185, %s186
      %p200 = scmp.eq.s32.totalorder %s40, 1
      %p201 = por %p199, %p200
      %p203 = scmp.ne.s32.totalorder %s186, %s202
      %p204 = scmp.eq.s32.totalorder %s40, 0
      %p205 = por %p203, %p204
      %p206 = scmp.le.s32.totalorder 1, %s34
      %p207 = scmp.lt.s32.totalorder %s34, 3
      %p208 = pnand %p206, %p207
      %p209 = pneg %p208
      // Predicated region
      $region9: #{tpu_custom_call.1} parent=5 // pred_check
        _
      $region10: #{tpu_custom_call.1} parent=5 // pred_check_branch
        %211 = sbr.rel (%p208) target = $region12
      $region11: #{tpu_custom_call.1} parent=5 // pred_region
        %s212 = ssub.s32 %s34, 1
        // Predicated region
        $region13: #{tpu_custom_call.1} parent=11 // pred_check
          %p213 = pneg %p121
        $region14: #{tpu_custom_call.1} parent=11 // pred_check_branch
          %215 = sbr.rel (%p213) target = $region16
        $region15: #{tpu_custom_call.1} parent=11 // pred_region
          %217 = vsyncadd [#allocation8], 0
          %s218 = sshll.u32 %s3, 4
          %s219 = int_to_ptr.hbm [resolvable:$true] %s218
          %s220 = sshll.u32 [#allocation9], 4
          %s221 = int_to_ptr.vmem [resolvable:$true] %s220
          %226 = dma.hbm_to_vmem [thread:$0]  %s219, 2048, %s221, [#allocation8], 128, 128, 8
        $region16: #{tpu_custom_call.1} parent=11 // pred_fallthru
          _
        // Predicated region
        $region17: #{tpu_custom_call.1} parent=11 // pred_check
          %p227 = pneg %p142
        $region18: #{tpu_custom_call.1} parent=11 // pred_check_branch
          %229 = sbr.rel (%p227) target = $region20
        $region19: #{tpu_custom_call.1} parent=11 // pred_region
          %231 = vsyncadd [#allocation11], 0
          %s232 = sshll.u32 %s4, 4
          %s233 = int_to_ptr.hbm [resolvable:$true] %s232
          %s234 = sshll.u32 [#allocation10], 4
          %s235 = int_to_ptr.vmem [resolvable:$true] %s234
          %240 = dma.hbm_to_vmem [thread:$0]  %s233, 2048, %s235, [#allocation11], 128, 128, 8
        $region20: #{tpu_custom_call.1} parent=11 // pred_fallthru
          _
      $region12: #{tpu_custom_call.1} parent=5 // pred_fallthru
        _
      %p241 = scmp.lt.s32.totalorder %s34, 2
      // Predicated region
      $region21: #{tpu_custom_call.1} parent=5 // pred_check
        %p242 = pneg %p241
      $region22: #{tpu_custom_call.1} parent=5 // pred_check_branch
        %244 = sbr.rel (%p242) target = $region24
      $region23: #{tpu_custom_call.1} parent=5 // pred_region
        // Predicated region
        $region25: #{tpu_custom_call.1} parent=23 // pred_check
          %p245 = pneg %p68
        $region26: #{tpu_custom_call.1} parent=23 // pred_check_branch
          %247 = sbr.rel (%p245) target = $region28
        $region27: #{tpu_custom_call.1} parent=23 // pred_region
          %s248 = sand.u32 %s58, 1
          %s249 = scalar_lea.sflag [#allocation5], %s248
          %s250 = sand.u32 %s58, 1
          %s251 = smul.addr %s250, 8
          %s252 = scalar_lea.vmem [#allocation4], %s251
          %254 = vsyncadd %s249, 0
          %s255 = sadd.s32 %s42, %s41
          %s256 = smul.addr %s255, 8
          %s257 = scalar_lea.hbm %s1, %s256
          %s259 = sshll.u32 %s257, 4
          %s260 = int_to_ptr.hbm [resolvable:$true] %s259
          %s261 = sshll.u32 %s252, 4
          %s262 = int_to_ptr.vmem [resolvable:$true] %s261
          %264 = dma.hbm_to_vmem [thread:$0]  %s260, 128, %s262, %s249
        $region28: #{tpu_custom_call.1} parent=23 // pred_fallthru
          _
        // Predicated region
        $region29: #{tpu_custom_call.1} parent=23 // pred_check
          %p265 = pneg %p94
        $region30: #{tpu_custom_call.1} parent=23 // pred_check_branch
          %267 = sbr.rel (%p265) target = $region32
        $region31: #{tpu_custom_call.1} parent=23 // pred_region
          %s268 = sand.u32 %s34, 1
          %s269 = scalar_lea.sflag [#allocation8], %s268
          %s270 = sand.u32 %s84, 1
          %s271 = smul.addr %s270, 128
          %s272 = scalar_lea.vmem [#allocation7], %s271
          %274 = vsyncadd %s269, 0
          %s275 = smul.addr %s41, 16
          %s276 = smul.addr %s275, 8
          %s277 = scalar_lea.hbm %s2, %s276
          %s278 = sshll.u32 %s277, 4
          %s279 = int_to_ptr.hbm [resolvable:$true] %s278
          %s280 = sshll.u32 %s272, 4
          %s281 = int_to_ptr.vmem [resolvable:$true] %s280
          %286 = dma.hbm_to_vmem [thread:$0]  %s279, 2048, %s281, %s269, 128, 128, 8
        $region32: #{tpu_custom_call.1} parent=23 // pred_fallthru
          _
      $region24: #{tpu_custom_call.1} parent=5 // pred_fallthru
        _
      %p287 = scmp.le.s32.totalorder 1, %s34
      %p288 = scmp.lt.s32.totalorder %s34, 3
      %p289 = pnand %p287, %p288
      %p290 = pneg %p289
      // Predicated region
      $region33: #{tpu_custom_call.1} parent=5 // pred_check
        _
      $region34: #{tpu_custom_call.1} parent=5 // pred_check_branch
        %292 = sbr.rel (%p289) target = $region36
      $region35: #{tpu_custom_call.1} parent=5 // pred_region
        %s293 = ssub.s32 %s34, 1
        %s294 = sand.u32 %s61, 1
        %s295 = scalar_lea.sflag [#allocation5], %s294
        %s296 = sand.u32 %s61, 1
        %s297 = smul.addr %s296, 8
        %s298 = scalar_lea.vmem [#allocation4], %s297
        // Predicated region
        $region37: #{tpu_custom_call.1} parent=35 // pred_check
          %p299 = pneg %p74
        $region38: #{tpu_custom_call.1} parent=35 // pred_check_branch
          %301 = sbr.rel (%p299) target = $region40
        $region39: #{tpu_custom_call.1} parent=35 // pred_region
          %303 = dma.done %s295, 128
        $region40: #{tpu_custom_call.1} parent=35 // pred_fallthru
          _
        %s304 = sand.u32 %s39, 1
        %s305 = scalar_lea.sflag [#allocation8], %s304
        %s306 = sand.u32 %s87, 1
        %s307 = smul.addr %s306, 128
        %s308 = scalar_lea.vmem [#allocation7], %s307
        // Predicated region
        $region41: #{tpu_custom_call.1} parent=35 // pred_check
          %p309 = pneg %p100
        $region42: #{tpu_custom_call.1} parent=35 // pred_check_branch
          %311 = sbr.rel (%p309) target = $region44
        $region43: #{tpu_custom_call.1} parent=35 // pred_region
          %313 = dma.done %s305, 2048
        $region44: #{tpu_custom_call.1} parent=35 // pred_fallthru
          _
        // Predicated region
        $region45: #{tpu_custom_call.1} parent=35 // pred_check
          %p314 = pneg %p121
        $region46: #{tpu_custom_call.1} parent=35 // pred_check_branch
          %316 = sbr.rel (%p314) target = $region48
        $region47: #{tpu_custom_call.1} parent=35 // pred_region
          %318 = dma.done [#allocation8], 2048
        $region48: #{tpu_custom_call.1} parent=35 // pred_fallthru
          _
        // Predicated region
        $region49: #{tpu_custom_call.1} parent=35 // pred_check
          %p319 = pneg %p142
        $region50: #{tpu_custom_call.1} parent=35 // pred_check_branch
          %321 = sbr.rel (%p319) target = $region52
        $region51: #{tpu_custom_call.1} parent=35 // pred_region
          %323 = dma.done [#allocation11], 2048
        $region52: #{tpu_custom_call.1} parent=35 // pred_fallthru
          _
        %s324 = sand.u32 %s61, 1
        %s325 = scalar_lea.sflag [#allocation5], %s324
        %s326 = sand.u32 %s61, 1
        %s327 = smul.addr %s326, 8
        %s328 = scalar_lea.vmem [#allocation4], %s327
        %p329 = pneg %p74
        %p330 = pneg %p71
        %s331 = sand.u32 %s39, 1
        %s332 = scalar_lea.sflag [#allocation8], %s331
        %s333 = sand.u32 %s87, 1
        %s334 = smul.addr %s333, 128
        %s335 = scalar_lea.vmem [#allocation7], %s334
        %p336 = pneg %p100
        %p337 = pneg %p97
        %p338 = pneg %p121
        %p339 = pneg %p118
        %p340 = pneg %p142
        %p341 = pneg %p139
        %p342 = pneg %p170
        %p343 = pneg %p167
        %s344 = sand.u32 %s157, 1
        %s345 = scalar_lea.sflag [#allocation6], %s344
        %s346 = sand.u32 %s157, 1
        %s347 = smul.addr %s346, 8
        %s348 = scalar_lea.vmem [#allocation12], %s347
        %p349 = pneg %p198
        %p350 = pneg %p195
        %s351 = sand.u32 %s185, 1
        %s352 = scalar_lea.sflag [#allocation14], %s351
        %s353 = sand.u32 %s185, 1
        %s354 = smul.addr %s353, 8
        %s355 = scalar_lea.vmem [#allocation13], %s354
        %v356 = vld [vmem:[%s298] sm:$0xff]
        %v357 = vld [vmem:[%s308] sm:$0xff]
        %v358 = vld [vmem:[%s308 + $0x8] sm:$0xff]
        %v359 = vld [vmem:[%s308 + $0x10] sm:$0xff]
        %v360 = vld [vmem:[%s308 + $0x18] sm:$0xff]
        %v361 = vld [vmem:[%s308 + $0x20] sm:$0xff]
        %v362 = vld [vmem:[%s308 + $0x28] sm:$0xff]
        %v363 = vld [vmem:[%s308 + $0x30] sm:$0xff]
        %v364 = vld [vmem:[%s308 + $0x38] sm:$0xff]
        %v365 = vld [vmem:[%s308 + $0x40] sm:$0xff]
        %v366 = vld [vmem:[%s308 + $0x48] sm:$0xff]
        %v367 = vld [vmem:[%s308 + $0x50] sm:$0xff]
        %v368 = vld [vmem:[%s308 + $0x58] sm:$0xff]
        %v369 = vld [vmem:[%s308 + $0x60] sm:$0xff]
        %v370 = vld [vmem:[%s308 + $0x68] sm:$0xff]
        %v371 = vld [vmem:[%s308 + $0x70] sm:$0xff]
        %v372 = vld [vmem:[%s308 + $0x78] sm:$0xff]
        %v373 = vld [vmem:[#allocation9] sm:$0xff]
        %v374 = vld [vmem:[#allocation9 + $0x8] sm:$0xff]
        %v375 = vld [vmem:[#allocation9 + $0x10] sm:$0xff]
        %v376 = vld [vmem:[#allocation9 + $0x18] sm:$0xff]
        %v377 = vld [vmem:[#allocation9 + $0x20] sm:$0xff]
        %v378 = vld [vmem:[#allocation9 + $0x28] sm:$0xff]
        %v379 = vld [vmem:[#allocation9 + $0x30] sm:$0xff]
        %v380 = vld [vmem:[#allocation9 + $0x38] sm:$0xff]
        %v381 = vld [vmem:[#allocation9 + $0x40] sm:$0xff]
        %v382 = vld [vmem:[#allocation9 + $0x48] sm:$0xff]
        %v383 = vld [vmem:[#allocation9 + $0x50] sm:$0xff]
        %v384 = vld [vmem:[#allocation9 + $0x58] sm:$0xff]
        %v385 = vld [vmem:[#allocation9 + $0x60] sm:$0xff]
        %v386 = vld [vmem:[#allocation9 + $0x68] sm:$0xff]
        %v387 = vld [vmem:[#allocation9 + $0x70] sm:$0xff]
        %v388 = vld [vmem:[#allocation9 + $0x78] sm:$0xff]
        %v389 = vld [vmem:[#allocation10] sm:$0xff]
        %v390 = vld [vmem:[#allocation10 + $0x8] sm:$0xff]
        %v391 = vld [vmem:[#allocation10 + $0x10] sm:$0xff]
        %v392 = vld [vmem:[#allocation10 + $0x18] sm:$0xff]
        %v393 = vld [vmem:[#allocation10 + $0x20] sm:$0xff]
        %v394 = vld [vmem:[#allocation10 + $0x28] sm:$0xff]
        %v395 = vld [vmem:[#allocation10 + $0x30] sm:$0xff]
        %v396 = vld [vmem:[#allocation10 + $0x38] sm:$0xff]
        %v397 = vld [vmem:[#allocation10 + $0x40] sm:$0xff]
        %v398 = vld [vmem:[#allocation10 + $0x48] sm:$0xff]
        %v399 = vld [vmem:[#allocation10 + $0x50] sm:$0xff]
        %v400 = vld [vmem:[#allocation10 + $0x58] sm:$0xff]
        %v401 = vld [vmem:[#allocation10 + $0x60] sm:$0xff]
        %v402 = vld [vmem:[#allocation10 + $0x68] sm:$0xff]
        %v403 = vld [vmem:[#allocation10 + $0x70] sm:$0xff]
        %v404 = vld [vmem:[#allocation10 + $0x78] sm:$0xff]
        %405 = vmatpush.xpose.msra.mxu0 %v372
        %406 = vmatpush.xpose.msra.mxu0 %v371
        %407 = vmatpush.xpose.msra.mxu0 %v370
        %408 = vmatpush.xpose.msra.mxu0 %v369
        %409 = vmatpush.xpose.msra.mxu0 %v368
        %410 = vmatpush.xpose.msra.mxu0 %v367
        %411 = vmatpush.xpose.msra.mxu0 %v366
        %412 = vmatpush.xpose.msra.mxu0 %v365
        %413 = vmatpush.xpose.msra.mxu0 %v364
        %414 = vmatpush.xpose.msra.mxu0 %v363
        %415 = vmatpush.xpose.msra.mxu0 %v362
        %416 = vmatpush.xpose.msra.mxu0 %v361
        %417 = vmatpush.xpose.msra.mxu0 %v360
        %418 = vmatpush.xpose.msra.mxu0 %v359
        %419 = vmatpush.xpose.msra.mxu0 %v358
        %420 = vmatpush.xpose.msra.mxu0 %v357
        %421 = vmatmul.f32.gmra.mxu0 %v356
        %v422 = vpop.f32.mrf.mxu0
        %v423 = vadd.f32 0.0, %v422
        %424 = vdwg.mxu0
        %s425 = sld [smem:[#allocation3 + %s43]]
        %v426 = vlaneseq
        %v427 = vand.u32 %v426, 127
        %v428 = vstv %s425
        %vm429 = vcmp.lt.s32.totalorder %v427, %v428
        %v430 = vsel %vm429, %v423, -inf
        %431 = vmax.xlane.f32.xlu0 %v430
        %v432 = vpop.xlane.xlu0 %431
        %v433 = vsub.f32 %v430, %v432
        %v434 = vmul.f32 %v433, 1.442695
        %v435 = vpow.pop %v434
        %436 = vadd.xlane.f32.xlu0 %v435
        %v437 = vpop.xlane.xlu0 %436
        %v438 = vrcp.pop %v437
        %v439 = vmul.f32 %v437, %v438
        %v440 = vsub.f32 2.0, %v439
        %v441 = vmul.f32 %v438, %v440
        %v442 = vmul.f32 %v435, %v441
        %443 = vmatpush.msra.mxu0 %v372
        %444 = vmatpush.msra.mxu0 %v371
        %445 = vmatpush.msra.mxu0 %v370
        %446 = vmatpush.msra.mxu0 %v369
        %447 = vmatpush.msra.mxu0 %v368
        %448 = vmatpush.msra.mxu0 %v367
        %449 = vmatpush.msra.mxu0 %v366
        %450 = vmatpush.msra.mxu0 %v365
        %451 = vmatpush.msra.mxu0 %v364
        %452 = vmatpush.msra.mxu0 %v363
        %453 = vmatpush.msra.mxu0 %v362
        %454 = vmatpush.msra.mxu0 %v361
        %455 = vmatpush.msra.mxu0 %v360
        %456 = vmatpush.msra.mxu0 %v359
        %457 = vmatpush.msra.mxu0 %v358
        %458 = vmatpush.msra.mxu0 %v357
        %459 = vmatmul.f32.gmra.mxu0 %v442
        %v460 = vpop.f32.mrf.mxu0
        %v461 = vadd.f32 0.0, %v460
        %462 = vdwg.mxu0
        %463 = vmatpush.msra.mxu0 %v404
        %464 = vmatpush.msra.mxu0 %v403
        %465 = vmatpush.msra.mxu0 %v402
        %466 = vmatpush.msra.mxu0 %v401
        %467 = vmatpush.msra.mxu0 %v400
        %468 = vmatpush.msra.mxu0 %v399
        %469 = vmatpush.msra.mxu0 %v398
        %470 = vmatpush.msra.mxu0 %v397
        %471 = vmatpush.msra.mxu0 %v396
        %472 = vmatpush.msra.mxu0 %v395
        %473 = vmatpush.msra.mxu0 %v394
        %474 = vmatpush.msra.mxu0 %v393
        %475 = vmatpush.msra.mxu0 %v392
        %476 = vmatpush.msra.mxu0 %v391
        %477 = vmatpush.msra.mxu0 %v390
        %478 = vmatpush.msra.mxu0 %v389
        %479 = vmatmul.f32.gmra.mxu0 %v356
        %v480 = vpop.f32.mrf.mxu0
        %v481 = vadd.f32 0.0, %v480
        %482 = vdwg.mxu0
        %483 = vmatpush.msra.mxu0 %v388
        %484 = vmatpush.msra.mxu0 %v387
        %485 = vmatpush.msra.mxu0 %v386
        %486 = vmatpush.msra.mxu0 %v385
        %487 = vmatpush.msra.mxu0 %v384
        %488 = vmatpush.msra.mxu0 %v383
        %489 = vmatpush.msra.mxu0 %v382
        %490 = vmatpush.msra.mxu0 %v381
        %491 = vmatpush.msra.mxu0 %v380
        %492 = vmatpush.msra.mxu0 %v379
        %493 = vmatpush.msra.mxu0 %v378
        %494 = vmatpush.msra.mxu0 %v377
        %495 = vmatpush.msra.mxu0 %v376
        %496 = vmatpush.msra.mxu0 %v375
        %497 = vmatpush.msra.mxu0 %v374
        %498 = vmatpush.msra.mxu0 %v373
        %499 = vmatmul.f32.gmra.mxu0 %v461
        %v500 = vpop.f32.mrf.mxu0
        %v501 = vadd.f32 %v481, %v500
        %502 = vdwg.mxu0
        %v503 = vtanh.pop %v501
        %504 = vst [vmem:[%s348] sm:$0xff] %v503
        %505 = vst [vmem:[%s355] sm:$0xff] %v442
        %s506 = sand.u32 %s157, 1
        %s507 = scalar_lea.sflag [#allocation6], %s506
        %s508 = sand.u32 %s157, 1
        %s509 = smul.addr %s508, 8
        %s510 = scalar_lea.vmem [#allocation12], %s509
        %s511 = sand.u32 %s185, 1
        %s512 = scalar_lea.sflag [#allocation14], %s511
        %s513 = sand.u32 %s185, 1
        %s514 = smul.addr %s513, 8
        %s515 = scalar_lea.vmem [#allocation13], %s514
        // Predicated region
        $region53: #{tpu_custom_call.1} parent=35 // pred_check
          %p516 = pneg %p167
        $region54: #{tpu_custom_call.1} parent=35 // pred_check_branch
          %518 = sbr.rel (%p516) target = $region56
        $region55: #{tpu_custom_call.1} parent=35 // pred_region
          %520 = vsyncadd %s507, 0
          %s521 = smul.addr %s44, 2
          %s522 = sadd.s32 %s43, %s521
          %s523 = smul.addr %s522, 8
          %s524 = scalar_lea.hbm %s5, %s523
          %s526 = sshll.u32 %s510, 4
          %s527 = int_to_ptr.vmem [resolvable:$true] %s526
          %s528 = sshll.u32 %s524, 4
          %s529 = int_to_ptr.hbm [resolvable:$true] %s528
          %531 = dma.vmem_to_hbm [thread:$0]  %s527, 128, %s529, %s507
        $region56: #{tpu_custom_call.1} parent=35 // pred_fallthru
          _
        // Predicated region
        $region57: #{tpu_custom_call.1} parent=35 // pred_check
          %p532 = pneg %p195
        $region58: #{tpu_custom_call.1} parent=35 // pred_check_branch
          %534 = sbr.rel (%p532) target = $region60
        $region59: #{tpu_custom_call.1} parent=35 // pred_region
          %536 = vsyncadd %s512, 0
          %s537 = smul.addr %s44, 2
          %s538 = sadd.s32 %s43, %s537
          %s539 = smul.addr %s538, 8
          %s540 = scalar_lea.hbm %s6, %s539
          %s542 = sshll.u32 %s515, 4
          %s543 = int_to_ptr.vmem [resolvable:$true] %s542
          %s544 = sshll.u32 %s540, 4
          %s545 = int_to_ptr.hbm [resolvable:$true] %s544
          %547 = dma.vmem_to_hbm [thread:$0]  %s543, 128, %s545, %s512
        $region60: #{tpu_custom_call.1} parent=35 // pred_fallthru
          _
      $region36: #{tpu_custom_call.1} parent=5 // pred_fallthru
        _
      %p548 = scmp.le.s32.totalorder 2, %s34
      // Predicated region
      $region61: #{tpu_custom_call.1} parent=5 // pred_check
        %p549 = pneg %p548
      $region62: #{tpu_custom_call.1} parent=5 // pred_check_branch
        %551 = sbr.rel (%p549) target = $region64
      $region63: #{tpu_custom_call.1} parent=5 // pred_region
        %s552 = ssub.s32 %s34, 2
        // Predicated region
        $region65: #{tpu_custom_call.1} parent=63 // pred_check
          %p553 = pneg %p173
        $region66: #{tpu_custom_call.1} parent=63 // pred_check_branch
          %555 = sbr.rel (%p553) target = $region68
        $region67: #{tpu_custom_call.1} parent=63 // pred_region
          %s556 = sand.u32 %s158, 1
          %s557 = scalar_lea.sflag [#allocation6], %s556
          %s558 = sand.u32 %s158, 1
          %s559 = smul.addr %s558, 8
          %s560 = scalar_lea.vmem [#allocation12], %s559
          %562 = dma.done %s557, 128
        $region68: #{tpu_custom_call.1} parent=63 // pred_fallthru
          _
        // Predicated region
        $region69: #{tpu_custom_call.1} parent=63 // pred_check
          %p563 = pneg %p201
        $region70: #{tpu_custom_call.1} parent=63 // pred_check_branch
          %565 = sbr.rel (%p563) target = $region72
        $region71: #{tpu_custom_call.1} parent=63 // pred_region
          %s566 = sand.u32 %s186, 1
          %s567 = scalar_lea.sflag [#allocation14], %s566
          %s568 = sand.u32 %s186, 1
          %s569 = smul.addr %s568, 8
          %s570 = scalar_lea.vmem [#allocation13], %s569
          %572 = dma.done %s567, 128
        $region72: #{tpu_custom_call.1} parent=63 // pred_fallthru
          _
      $region64: #{tpu_custom_call.1} parent=5 // pred_fallthru
        _
    $region6: #{tpu_custom_call.1} parent=1 // loop_footer
      %s38 = sadd.s32 1, %s34
    $region7: #{tpu_custom_call.1} parent=1 // loop_footer_branch
      %33 = sbr.rel target = $region3
    $region8: #{tpu_custom_call.1} parent=1 // loop_exit
      _
    %573 = vsyncpa [#allocation5], 1
    %s574 = scalar_lea.sflag [#allocation5], 1
    %575 = vsyncpa %s574, 1
    %576 = vsyncpa [#allocation8], 1
    %s577 = scalar_lea.sflag [#allocation8], 1
    %578 = vsyncpa %s577, 1
    %579 = vsyncpa [#allocation11], 1
    %580 = vsyncpa [#allocation6], 1
    %s581 = scalar_lea.sflag [#allocation6], 1
    %582 = vsyncpa %s581, 1
    %583 = vsyncpa [#allocation14], 1
    %s584 = scalar_lea.sflag [#allocation14], 1
    %585 = vsyncpa %s584, 1

</llo_original>
